<compile_context>
chip_gen: v7x
topology: tpu7x:2x2x1
jax: 0.10.0
libtpu: 0.0.40
codegen_flags: <defaults>
</compile_context>

<pallas_src>
import functools

import jax
import jax.numpy as jnp
from jax.experimental import pallas as pl
from jax.experimental.pallas import tpu as pltpu


def _round_up(n, m):
    return ((n + m - 1) // m) * m


def _cdiv(a, b):
    return -(-a // b)


def gate_kernel(x_ref, w_ref, b_ref, g_ref, out_ref, *, hard_sample: bool):
    """One batch block of the Gate forward.

    x_ref   : (Bt, C, H*W) f32  activations, lane-dense fused spatial axis
    w_ref   : (C, O_pad)        folded weight = (w0 @ w1) / (H*W), zero-padded cols
    b_ref   : (1, O_pad)        folded bias   = b0 @ w1 + b1,      zero-padded cols
    g_ref   : (Bt, O_pad)       pre-sampled Gumbel(0,1) noise (-1e30 in padded lanes)
    out_ref : (Bt, O_pad)       output gate (padded lanes are 0)
    """
    # ---- global spatial pool: raw sum; the 1/(H*W) scale is folded into w ----
    pooled = jnp.sum(x_ref[...], axis=-1)                               # (Bt, C)

    # ---- single folded linear (line1(line0(.)) collapsed) --------------------
    logits = jnp.dot(pooled, w_ref[...],
                     preferred_element_type=jnp.float32) + b_ref[...]   # (Bt, O_pad)

    # ---- gumbel softmax (tau = 1) --------------------------------------------
    y = logits + g_ref[...]                                             # padded lanes ~ -1e30

    if hard_sample:
        # Straight-through forward value: one-hot at the FIRST argmax of
        # logits + gumbel (softmax is monotone, so no need to compute it).
        mx = jnp.max(y, axis=-1, keepdims=True)
        cols = jax.lax.broadcasted_iota(jnp.int32, y.shape, 1)
        cand = jnp.where(y == mx, cols, jnp.int32(y.shape[-1]))
        first = jnp.min(cand, axis=-1, keepdims=True)
        out_ref[...] = (cols == first).astype(out_ref.dtype)
    else:
        y = y - jnp.max(y, axis=-1, keepdims=True)
        e = jnp.exp(y)
        out_ref[...] = e / jnp.sum(e, axis=-1, keepdims=True)


def gate_forward(x_nchw, params, gumbel, hard_sample=False):
    """x_nchw: (B, C, H, W) f32. Returns gate of shape (B, options, 1, 1)."""
    B, C, H, W = x_nchw.shape
    HW = H * W
    O = params["w1"].shape[-1]

    # ---- fold the two linears + pooling scale (exact, done once on the host) --
    w_fold = (params["w0"] @ params["w1"]) * jnp.float32(1.0 / HW)      # (C, O)
    b_fold = params["b0"] @ params["w1"] + params["b1"]                 # (1, O)

    # ---- lane-dense option axis ------------------------------------------------
    O_pad = _round_up(O, 128)
    if O_pad != O:
        w_fold = jnp.pad(w_fold, ((0, 0), (0, O_pad - O)))
        b_fold = jnp.pad(b_fold, ((0, 0), (0, O_pad - O)))

    # ---- batch tile from a VMEM budget ------------------------------------------
    # Per batch row we stream (double-buffered): x (C*HW f32) in, gumbel (O_pad)
    # in, gate (O_pad) out.  Keep the whole streamed working set under ~40 MiB so
    # it fits v7x's 64 MiB VMEM/TC with headroom (v5e/v6e have 128 MiB physical).
    STREAM_BUDGET = 40 << 20
    row_stream_bytes = 2 * (C * HW + 2 * O_pad) * 4
    Bt_cap = max(8, (STREAM_BUDGET // row_stream_bytes) // 8 * 8)

    B8 = _round_up(B, 8)
    grid_n = max(1, _cdiv(B8, Bt_cap))
    if B8 > 8:
        grid_n = max(grid_n, 2)      # >=2 blocks so "parallel" shards across v7x's 2 TCs
    Bt = _round_up(_cdiv(B8, grid_n), 8)
    B_pad = grid_n * Bt

    # ---- pad inputs (zero rows for x; -1e30 in padded gumbel lanes) -------------
    x = x_nchw.reshape(B, C, HW)      # free reshape: contiguous, lane-dense H*W
    if B_pad != B:
        x = jnp.pad(x, ((0, B_pad - B), (0, 0), (0, 0)))
    if B_pad != B or O_pad != O:
        g = jnp.full((B_pad, O_pad), -1e30, jnp.float32).at[:B, :O].set(gumbel)
    else:
        g = gumbel

    # ---- explicit VMEM budget derived from the actual block sizes ---------------
    x_blk_bytes = Bt * C * HW * 4
    go_blk_bytes = Bt * O_pad * 4
    w_bytes = (C * O_pad + O_pad) * 4
    vmem_need = 2 * x_blk_bytes + 4 * go_blk_bytes + 2 * w_bytes + (2 << 20)
    vmem_limit = int(min(56 << 20, max(16 << 20, vmem_need)))

    kernel = functools.partial(gate_kernel, hard_sample=hard_sample)
    gate_p = pl.pallas_call(
        kernel,
        out_shape=jax.ShapeDtypeStruct((B_pad, O_pad), jnp.float32),
        grid_spec=pltpu.PrefetchScalarGridSpec(
            num_scalar_prefetch=0,
            grid=(grid_n,),
            in_specs=[
                pl.BlockSpec((Bt, C, HW), lambda i: (i, 0, 0)),   # x, per batch block
                pl.BlockSpec((C, O_pad), lambda i: (0, 0)),       # folded weight (resident)
                pl.BlockSpec((1, O_pad), lambda i: (0, 0)),       # folded bias
                pl.BlockSpec((Bt, O_pad), lambda i: (i, 0)),      # gumbel noise
            ],
            out_specs=pl.BlockSpec((Bt, O_pad), lambda i: (i, 0)),
        ),
        compiler_params=pltpu.CompilerParams(
            dimension_semantics=("parallel",),
            vmem_limit_bytes=vmem_limit,
        ),
    )(x, w_fold, b_fold, g)

    return gate_p[:B, :O].reshape(B, O, 1, 1)


def ref_forward(x_nchw, p, gumbel, hard_sample=False):
    """Pure-JAX reference of the same forward."""
    pooled = jnp.mean(x_nchw, axis=(2, 3))
    h = pooled @ p["w0"] + p["b0"]
    logits = h @ p["w1"] + p["b1"]
    soft = jax.nn.softmax(logits + gumbel, axis=-1)
    if hard_sample:
        out = jax.nn.one_hot(jnp.argmax(soft, axis=-1), soft.shape[-1],
                             dtype=soft.dtype)
    else:
        out = soft
    return out.reshape(x_nchw.shape[0], -1, 1, 1)


if __name__ == "__main__":
    # small shapes: batch=2, in_planes=8, spatial=16x16, options=2
    B, C, H, W, O = 2, 8, 16, 16, 2
    key = jax.random.PRNGKey(0)
    kx, kw0, kb0, kw1, kb1, kg = jax.random.split(key, 6)

    x = jax.random.normal(kx, (B, C, H, W), jnp.float32)
    params = {
        # Linear weights stored pre-transposed: y = x @ W + b
        "w0": 0.3 * jax.random.normal(kw0, (C, C), jnp.float32),
        "b0": 0.1 * jax.random.normal(kb0, (1, C), jnp.float32),
        "w1": 0.3 * jax.random.normal(kw1, (C, O), jnp.float32),
        "b1": 0.1 * jax.random.normal(kb1, (1, O), jnp.float32),
    }
    # deterministic Gumbel noise (PyTorch samples it inside F.gumbel_softmax)
    u = jax.random.uniform(kg, (B, O), jnp.float32, minval=1e-6, maxval=1.0 - 1e-6)
    gumbel = -jnp.log(-jnp.log(u))

    # default: hard_sample=False (soft gumbel-softmax sample)
    gate = jax.block_until_ready(gate_forward(x, params, gumbel))
    gate_ref = ref_forward(x, params, gumbel)
    assert gate.shape == (B, O, 1, 1)
    assert jnp.allclose(gate, gate_ref, atol=1e-5, rtol=1e-5)

    # hard_sample=True forward value (one-hot straight-through sample)
    gate_h = jax.block_until_ready(gate_forward(x, params, gumbel, hard_sample=True))
    gate_h_ref = ref_forward(x, params, gumbel, hard_sample=True)
    assert jnp.allclose(gate_h, gate_h_ref)

    # non-multiple-of-8 batch: exercises zero-padding + >=2-block grid
    kx2, kg2 = jax.random.split(jax.random.PRNGKey(1))
    B2 = 20
    x2 = jax.random.normal(kx2, (B2, C, H, W), jnp.float32)
    u2 = jax.random.uniform(kg2, (B2, O), jnp.float32, minval=1e-6, maxval=1.0 - 1e-6)
    g2 = -jnp.log(-jnp.log(u2))
    gate2 = jax.block_until_ready(gate_forward(x2, params, g2))
    gate2_ref = ref_forward(x2, params, g2)
    assert jnp.allclose(gate2, gate2_ref, atol=1e-5, rtol=1e-5)

    # large batch: exercises the VMEM-budgeted big batch tile (Bt >> 8)
    kx3, kg3 = jax.random.split(jax.random.PRNGKey(2))
    B3 = 2048
    x3 = jax.random.normal(kx3, (B3, C, H, W), jnp.float32)
    u3 = jax.random.uniform(kg3, (B3, O), jnp.float32, minval=1e-6, maxval=1.0 - 1e-6)
    g3 = -jnp.log(-jnp.log(u3))
    gate3 = jax.block_until_ready(gate_forward(x3, params, g3))
    gate3_ref = ref_forward(x3, params, g3)
    assert jnp.allclose(gate3, gate3_ref, atol=1e-5, rtol=1e-5)

    print("KERNEL_OK")
</pallas_src>

<mosaic_0001>
module attributes {stable_mosaic.version = 11 : i64} {
  func.func @gate_kernel(%arg0: i32, %arg1: memref<8x8x256xf32, #tpu.memory_space<vmem>>, %arg2: memref<8x128xf32, #tpu.memory_space<vmem>>, %arg3: memref<1x128xf32, #tpu.memory_space<vmem>>, %arg4: memref<8x128xf32, #tpu.memory_space<vmem>>, %arg5: memref<8x128xf32, #tpu.memory_space<vmem>>) attributes {dimension_semantics = [#tpu.dimension_semantics<parallel>], iteration_bounds = array<i64: 1>, scalar_prefetch = 0 : i64, scratch_operands = 0 : i64, tpu.core_type = #tpu.core_type<tc>, window_params = [{transform_indices = @transform_0, window_bounds = array<i64: 8, 8, 256>}, {pipeline_mode = #tpu.pipeline_mode<synchronous>, transform_indices = @transform_1, window_bounds = array<i64: 8, 128>}, {pipeline_mode = #tpu.pipeline_mode<synchronous>, transform_indices = @transform_2, window_bounds = array<i64: 1, 128>}, {transform_indices = @transform_3, window_bounds = array<i64: 8, 128>}, {transform_indices = @transform_4, window_bounds = array<i64: 8, 128>}]} {
    %c0 = arith.constant 0 : index
    %c0_0 = arith.constant 0 : index
    %c0_1 = arith.constant 0 : index
    %0 = vector.load %arg1[%c0, %c0_0, %c0_1] : memref<8x8x256xf32, #tpu.memory_space<vmem>>, vector<8x8x256xf32>
    %cst = arith.constant dense<0.000000e+00> : vector<8x8xf32>
    %1 = vector.multi_reduction <add>, %0, %cst [2] : vector<8x8x256xf32> to vector<8x8xf32>
    %c0_2 = arith.constant 0 : index
    %c0_3 = arith.constant 0 : index
    %2 = vector.load %arg2[%c0_2, %c0_3] : memref<8x128xf32, #tpu.memory_space<vmem>>, vector<8x128xf32>
    %cst_4 = arith.constant dense<0.000000e+00> : vector<8x128xf32>
    %3 = tpu.matmul %1, %2, %cst_4 {dimension_numbers = #tpu.dot_dimension_numbers<[1], [0], [0], [1], [0, 0, 1, 1], [], []>} : vector<8x8xf32>, vector<8x128xf32>, vector<8x128xf32> -> vector<8x128xf32>
    %c0_5 = arith.constant 0 : index
    %c0_6 = arith.constant 0 : index
    %4 = vector.load %arg3[%c0_5, %c0_6] : memref<1x128xf32, #tpu.memory_space<vmem>>, vector<1x128xf32>
    %5 = vector.broadcast %4 : vector<1x128xf32> to vector<8x128xf32>
    %6 = arith.addf %3, %5 : vector<8x128xf32>
    %c0_7 = arith.constant 0 : index
    %c0_8 = arith.constant 0 : index
    %7 = vector.load %arg4[%c0_7, %c0_8] : memref<8x128xf32, #tpu.memory_space<vmem>>, vector<8x128xf32>
    %8 = arith.addf %6, %7 : vector<8x128xf32>
    %cst_9 = arith.constant dense<0xFF800000> : vector<8xf32>
    %9 = vector.multi_reduction <maximumf>, %8, %cst_9 [1] : vector<8x128xf32> to vector<8xf32>
    %10 = vector.shape_cast %9 : vector<8xf32> to vector<8x1xf32>
    %11 = vector.broadcast %10 : vector<8x1xf32> to vector<8x128xf32>
    %12 = arith.subf %8, %11 : vector<8x128xf32>
    %13 = math.exp %12 : vector<8x128xf32>
    %cst_10 = arith.constant dense<0.000000e+00> : vector<8xf32>
    %14 = vector.multi_reduction <add>, %13, %cst_10 [1] : vector<8x128xf32> to vector<8xf32>
    %15 = vector.shape_cast %14 : vector<8xf32> to vector<8x1xf32>
    %16 = vector.broadcast %15 : vector<8x1xf32> to vector<8x128xf32>
    %17 = arith.divf %13, %16 : vector<8x128xf32>
    %c0_11 = arith.constant 0 : index
    %c0_12 = arith.constant 0 : index
    %18 = vector.load %arg5[%c0_11, %c0_12] : memref<8x128xf32, #tpu.memory_space<vmem>>, vector<8x128xf32>
    tpu.vector_store %arg5[%c0_11, %c0_12], %17 {strides = array<i32>} : memref<8x128xf32, #tpu.memory_space<vmem>>, vector<8x128xf32>,
    return
  }
  func.func @transform_0(%arg0: i32) -> (i32, i32, i32) {
    %c0_i32 = arith.constant 0 : i32
    %c0_i32_0 = arith.constant 0 : i32
    %c0_i32_1 = arith.constant 0 : i32
    return %arg0, %c0_i32, %c0_i32_0 : i32, i32, i32
  }
  func.func @transform_1(%arg0: i32) -> (i32, i32) {
    %c0_i32 = arith.constant 0 : i32
    %c0_i32_0 = arith.constant 0 : i32
    %c0_i32_1 = arith.constant 0 : i32
    return %c0_i32, %c0_i32_0 : i32, i32
  }
  func.func @transform_2(%arg0: i32) -> (i32, i32) {
    %c0_i32 = arith.constant 0 : i32
    %c0_i32_0 = arith.constant 0 : i32
    %c0_i32_1 = arith.constant 0 : i32
    return %c0_i32, %c0_i32_0 : i32, i32
  }
  func.func @transform_3(%arg0: i32) -> (i32, i32) {
    %c0_i32 = arith.constant 0 : i32
    %c0_i32_0 = arith.constant 0 : i32
    return %arg0, %c0_i32 : i32, i32
  }
  func.func @transform_4(%arg0: i32) -> (i32, i32) {
    %c0_i32 = arith.constant 0 : i32
    %c0_i32_0 = arith.constant 0 : i32
    return %arg0, %c0_i32 : i32, i32
  }
}

</mosaic_0001>

<llo_original>
// kernel: tpu_custom_call.1
$region0: #{tpu_custom_call.1}
  #allocation0 [shape = 'u32[]', space=smem, size = 0x4, offset = 0x4, fixed_abs, tag = 'smem constant byte address 0x4 - core index']
  #allocation1 [shape = 'u32[144,128]{1,0:T(1,128)}', space=vmem, size = 0x12000, scoped, tag = 'internal scratch']
  %s0 = inlined_call_operand.hbm [shape: f32[8,8,256], index: 0, kind: input, shape index: {}]
  %s1 = inlined_call_operand.hbm [shape: f32[8,128], index: 1, kind: input, shape index: {}]
  %s2 = inlined_call_operand.vmem [shape: f32[1,128], index: 2, kind: input, shape index: {}]
  %s3 = inlined_call_operand.vmem [shape: f32[8,128], index: 3, kind: input, shape index: {}]
  %s4 = inlined_call_operand.hbm [shape: f32[8,128], index: 4, kind: output, shape index: {}]
  %s5 = sld [smem:[#allocation0]]
  $region34: #{tpu_custom_call.1} parent=0
    _
  %s7 = ssub.s32 1, %s5
  %s8 = scalar_select 0, %s7, %s5
  $region1: #{tpu_custom_call.1} parent=0
    #allocation2 [shape = 'u8[65536]{0}', space=vmem, size = 0x10000, scoped, tag = 'input window, operand 0, single buffered']
    #allocation3 [shape = 's32[1]{0}', space=sflag, size = 0x4, scoped, tag = 'scoped memory for tpu_custom_call.1']
    #allocation4 [shape = 's32[1]{0}', space=sflag, size = 0x4, scoped, tag = 'scoped memory for tpu_custom_call.1']
    #allocation5 [shape = 'u8[4096]{0}', space=vmem, size = 0x1000, scoped, tag = 'input window, operand 1, single buffered']
    #allocation6 [shape = 's32[1]{0}', space=sflag, size = 0x4, scoped, tag = 'scoped memory for tpu_custom_call.1']
    #allocation7 [shape = 'u8[4096]{0}', space=vmem, size = 0x1000, scoped, tag = 'output window, operand 0, single buffered']
    %9 = vsyncpa [#allocation3], 0
    %10 = vsyncpa [#allocation6], 0
    %11 = vsyncpa [#allocation4], 0
    // Predicated region
    $region2: #{tpu_custom_call.1} parent=1 // pred_check
      _
    $region3: #{tpu_custom_call.1} parent=1 // pred_check_branch
      %13 = sbr.rel (0) target = $region5
    $region4: #{tpu_custom_call.1} parent=1 // pred_region
      %s15 = ssub.s32 2048, 2048
      %16 = vsyncadd [#allocation3], %s15
      %s17 = sshll.u32 [#allocation2], 4
      %s18 = int_to_ptr.vmem [resolvable:$true] %s17
      %23 = dma.hbm_to_vmem [thread:$0]  %s0, 2048, %s18, [#allocation3], 256, 256, 16
    $region5: #{tpu_custom_call.1} parent=1 // pred_fallthru
      _
    // Predicated region
    $region6: #{tpu_custom_call.1} parent=1 // pred_check
      _
    $region7: #{tpu_custom_call.1} parent=1 // pred_check_branch
      %25 = sbr.rel (0) target = $region9
    $region8: #{tpu_custom_call.1} parent=1 // pred_region
      %s27 = ssub.s32 128, 128
      %28 = vsyncadd [#allocation6], %s27
      %s30 = sshll.u32 [#allocation5], 4
      %s31 = int_to_ptr.vmem [resolvable:$true] %s30
      %33 = dma.hbm_to_vmem [thread:$0]  %s1, 128, %s31, [#allocation6]
    $region9: #{tpu_custom_call.1} parent=1 // pred_fallthru
      _
    // Predicated region
    $region10: #{tpu_custom_call.1} parent=1 // pred_check
      _
    $region11: #{tpu_custom_call.1} parent=1 // pred_check_branch
      %35 = sbr.rel (0) target = $region13
    $region12: #{tpu_custom_call.1} parent=1 // pred_region
      _
    $region13: #{tpu_custom_call.1} parent=1 // pred_fallthru
      _
    // Predicated region
    $region14: #{tpu_custom_call.1} parent=1 // pred_check
      _
    $region15: #{tpu_custom_call.1} parent=1 // pred_check_branch
      %37 = sbr.rel (0) target = $region17
    $region16: #{tpu_custom_call.1} parent=1 // pred_region
      _
    $region17: #{tpu_custom_call.1} parent=1 // pred_fallthru
      _
    // Predicated region
    $region18: #{tpu_custom_call.1} parent=1 // pred_check
      _
    $region19: #{tpu_custom_call.1} parent=1 // pred_check_branch
      %39 = sbr.rel (0) target = $region21
    $region20: #{tpu_custom_call.1} parent=1 // pred_region
      %40 = dma.done [#allocation3], 2048
    $region21: #{tpu_custom_call.1} parent=1 // pred_fallthru
      _
    // Predicated region
    $region22: #{tpu_custom_call.1} parent=1 // pred_check
      _
    $region23: #{tpu_custom_call.1} parent=1 // pred_check_branch
      %42 = sbr.rel (0) target = $region25
    $region24: #{tpu_custom_call.1} parent=1 // pred_region
      %43 = dma.done [#allocation6], 128
    $region25: #{tpu_custom_call.1} parent=1 // pred_fallthru
      _
    %v44 = vld [vmem:[#allocation2] sm:$0xff]
    %v45 = vld [vmem:[#allocation2 + $0x8] sm:$0xff]
    %v46 = vld [vmem:[#allocation2 + $0x10] sm:$0xff]
    %v47 = vld [vmem:[#allocation2 + $0x18] sm:$0xff]
    %v48 = vld [vmem:[#allocation2 + $0x20] sm:$0xff]
    %v49 = vld [vmem:[#allocation2 + $0x28] sm:$0xff]
    %v50 = vld [vmem:[#allocation2 + $0x30] sm:$0xff]
    %v51 = vld [vmem:[#allocation2 + $0x38] sm:$0xff]
    %v52 = vld [vmem:[#allocation2 + $0x40] sm:$0xff]
    %v53 = vld [vmem:[#allocation2 + $0x48] sm:$0xff]
    %v54 = vld [vmem:[#allocation2 + $0x50] sm:$0xff]
    %v55 = vld [vmem:[#allocation2 + $0x58] sm:$0xff]
    %v56 = vld [vmem:[#allocation2 + $0x60] sm:$0xff]
    %v57 = vld [vmem:[#allocation2 + $0x68] sm:$0xff]
    %v58 = vld [vmem:[#allocation2 + $0x70] sm:$0xff]
    %v59 = vld [vmem:[#allocation2 + $0x78] sm:$0xff]
    %v60 = vadd.f32 %v44, %v45
    %61 = vadd.xlane.f32.xlu0 %v60
    %v62 = vpop.xlane.xlu0 %61
    %v63 = vadd.f32 %v46, %v47
    %64 = vadd.xlane.f32.xlu0 %v63
    %v65 = vpop.xlane.xlu0 %64
    %v66 = vadd.f32 %v48, %v49
    %67 = vadd.xlane.f32.xlu0 %v66
    %v68 = vpop.xlane.xlu0 %67
    %v69 = vadd.f32 %v50, %v51
    %70 = vadd.xlane.f32.xlu0 %v69
    %v71 = vpop.xlane.xlu0 %70
    %v72 = vadd.f32 %v52, %v53
    %73 = vadd.xlane.f32.xlu0 %v72
    %v74 = vpop.xlane.xlu0 %73
    %v75 = vadd.f32 %v54, %v55
    %76 = vadd.xlane.f32.xlu0 %v75
    %v77 = vpop.xlane.xlu0 %76
    %v78 = vadd.f32 %v56, %v57
    %79 = vadd.xlane.f32.xlu0 %v78
    %v80 = vpop.xlane.xlu0 %79
    %v81 = vadd.f32 %v58, %v59
    %82 = vadd.xlane.f32.xlu0 %v81
    %v83 = vpop.xlane.xlu0 %82
    %v84 = vld [vmem:[#allocation5] sm:$0xff]
    %v85 = vld [vmem:[%s2] sm:$0x1]
    %v87 = vlaneseq
    %v88 = vshrl.u32 %v87, 7
    %v89 = vsub.s32 0, %v88
    %v90 = vrot.slane %v85, %v89
    %v100 = vlaneseq
    %v101 = vand.u32 %v100, 127
    %v102 = vlaneseq
    %v103 = vshrl.u32 %v102, 7
    %v104 = vsub.s32 %v101, %v103
    %v105 = vrot.slane %v62, %v104
    %v106 = vlaneseq
    %v107 = vshrl.u32 %v106, 7
    %v108 = vsub.s32 %v101, %v107
    %v109 = vrot.slane %v65, %v108
    %v110 = vlaneseq
    %v111 = vshrl.u32 %v110, 7
    %v112 = vsub.s32 %v101, %v111
    %v113 = vrot.slane %v68, %v112
    %v114 = vlaneseq
    %v115 = vshrl.u32 %v114, 7
    %v116 = vsub.s32 %v101, %v115
    %v117 = vrot.slane %v71, %v116
    %v118 = vlaneseq
    %v119 = vshrl.u32 %v118, 7
    %v120 = vsub.s32 %v101, %v119
    %v121 = vrot.slane %v74, %v120
    %v122 = vlaneseq
    %v123 = vshrl.u32 %v122, 7
    %v124 = vsub.s32 %v101, %v123
    %v125 = vrot.slane %v77, %v124
    %v126 = vlaneseq
    %v127 = vshrl.u32 %v126, 7
    %v128 = vsub.s32 %v101, %v127
    %v129 = vrot.slane %v80, %v128
    %v130 = vlaneseq
    %v131 = vshrl.u32 %v130, 7
    %v132 = vsub.s32 %v101, %v131
    %v133 = vrot.slane %v83, %v132
    %vm134 = vcmask 1041409
    %v135 = vsel %vm134, %v109, %v105
    %vm136 = vcmask 1042434
    %v137 = vsel %vm136, %v113, %v135
    %vm138 = vcmask 1043459
    %v139 = vsel %vm138, %v117, %v137
    %vm140 = vcmask 1044484
    %v141 = vsel %vm140, %v121, %v139
    %vm142 = vcmask 1045509
    %v143 = vsel %vm142, %v125, %v141
    %vm144 = vcmask 1046534
    %v145 = vsel %vm144, %v129, %v143
    %vm146 = vcmask 1047559
    %v147 = vsel %vm146, %v133, %v145
    %vm148 = vcmask 64512
    %v149 = vsel %vm148, %v147, 0
    %151 = vmatprep.subr.mxu0 0.0
    %152 = vmatpush1.msra.mxu0 %v84
    %153 = vmatprep.subr.mxu0 0.0
    %154 = vmatpush1.msra.mxu0 0.0
    %155 = vmatprep.subr.mxu0 0.0
    %156 = vmatpush1.msra.mxu0 0.0
    %157 = vmatprep.subr.mxu0 0.0
    %158 = vmatpush1.msra.mxu0 0.0
    %159 = vmatprep.subr.mxu0 0.0
    %160 = vmatpush1.msra.mxu0 0.0
    %161 = vmatprep.subr.mxu0 0.0
    %162 = vmatpush1.msra.mxu0 0.0
    %163 = vmatprep.subr.mxu0 0.0
    %164 = vmatpush1.msra.mxu0 0.0
    %165 = vmatprep.subr.mxu0 0.0
    %166 = vmatpush1.msra.mxu0 0.0
    %167 = vmatprep.subr.mxu0 0.0
    %168 = vmatpush1.msra.mxu0 0.0
    %169 = vmatprep.subr.mxu0 0.0
    %170 = vmatpush1.msra.mxu0 0.0
    %171 = vmatprep.subr.mxu0 0.0
    %172 = vmatpush1.msra.mxu0 0.0
    %173 = vmatprep.subr.mxu0 0.0
    %174 = vmatpush1.msra.mxu0 0.0
    %175 = vmatprep.subr.mxu0 0.0
    %176 = vmatpush1.msra.mxu0 0.0
    %177 = vmatprep.subr.mxu0 0.0
    %178 = vmatpush1.msra.mxu0 0.0
    %179 = vmatprep.subr.mxu0 0.0
    %180 = vmatpush1.msra.mxu0 0.0
    %181 = vmatprep.subr.mxu0 0.0
    %182 = vmatpush1.msra.mxu0 0.0
    %183 = vmatprep.subr.mxu0 0.0
    %184 = vmatpush1.msra.mxu0 0.0
    %185 = vmatprep.subr.mxu0 0.0
    %186 = vmatpush1.msra.mxu0 0.0
    %187 = vmatprep.subr.mxu0 0.0
    %188 = vmatpush1.msra.mxu0 0.0
    %189 = vmatprep.subr.mxu0 0.0
    %190 = vmatpush1.msra.mxu0 0.0
    %191 = vmatprep.subr.mxu0 0.0
    %192 = vmatpush1.msra.mxu0 0.0
    %193 = vmatprep.subr.mxu0 0.0
    %194 = vmatpush1.msra.mxu0 0.0
    %195 = vmatprep.subr.mxu0 0.0
    %196 = vmatpush1.msra.mxu0 0.0
    %197 = vmatprep.subr.mxu0 0.0
    %198 = vmatpush1.msra.mxu0 0.0
    %199 = vmatprep.subr.mxu0 0.0
    %200 = vmatpush1.msra.mxu0 0.0
    %201 = vmatprep.subr.mxu0 0.0
    %202 = vmatpush1.msra.mxu0 0.0
    %203 = vmatprep.subr.mxu0 0.0
    %204 = vmatpush1.msra.mxu0 0.0
    %205 = vmatprep.subr.mxu0 0.0
    %206 = vmatpush1.msra.mxu0 0.0
    %207 = vmatprep.subr.mxu0 0.0
    %208 = vmatpush1.msra.mxu0 0.0
    %209 = vmatprep.subr.mxu0 0.0
    %210 = vmatpush1.msra.mxu0 0.0
    %211 = vmatprep.subr.mxu0 0.0
    %212 = vmatpush1.msra.mxu0 0.0
    %213 = vmatprep.subr.mxu0 0.0
    %214 = vmatpush1.msra.mxu0 0.0
    %215 = vmatprep.mubr.f32.mxu0 0.0
    %216 = vmatmul.mubr.f32.gmra.mrb[0].mxu0 %v149
    %v217 = vpop.f32.mrb[0].mxu0
    %v218 = vadd.f32 %v90, %v217
    %v219 = vpop.f32.mrb[0].mxu0
    %220 = vdwg.mxu0
    %v221 = vld [vmem:[%s3] sm:$0xff]
    %v222 = vadd.f32 %v218, %v221
    %223 = vmax.xlane.f32.xlu0 %v222
    %v224 = vpop.xlane.xlu0 %223
    %v225 = vsub.f32 %v222, %v224
    %v226 = vmul.f32 %v225, 1.442695
    %v227 = vpow.pop %v226
    %228 = vadd.xlane.f32.xlu0 %v227
    %v229 = vpop.xlane.xlu0 %228
    %v230 = vrcp.pop %v229
    %v231 = vmul.f32 %v227, %v230
    %232 = vst [vmem:[#allocation7] sm:$0xff] %v231
    // Predicated region
    $region26: #{tpu_custom_call.1} parent=1 // pred_check
      _
    $region27: #{tpu_custom_call.1} parent=1 // pred_check_branch
      %234 = sbr.rel (0) target = $region29
    $region28: #{tpu_custom_call.1} parent=1 // pred_region
      %s236 = ssub.s32 128, 128
      %237 = vsyncadd [#allocation4], %s236
      %s239 = sshll.u32 [#allocation7], 4
      %s240 = int_to_ptr.vmem [resolvable:$true] %s239
      %242 = dma.vmem_to_hbm [thread:$0]  %s240, 128, %s4, [#allocation4]
    $region29: #{tpu_custom_call.1} parent=1 // pred_fallthru
      _
    // Predicated region
    $region30: #{tpu_custom_call.1} parent=1 // pred_check
      _
    $region31: #{tpu_custom_call.1} parent=1 // pred_check_branch
      %244 = sbr.rel (0) target = $region33
    $region32: #{tpu_custom_call.1} parent=1 // pred_region
      %245 = dma.done [#allocation4], 128
    $region33: #{tpu_custom_call.1} parent=1 // pred_fallthru
      _
    %246 = vsyncpa [#allocation3], 1
    %247 = vsyncpa [#allocation6], 1
    %248 = vsyncpa [#allocation4], 1

</llo_original>
